<compile_context>
chip_gen: v6e
topology: v6e:2x2x1
jax: 0.10.0
libtpu: 0.0.40
codegen_flags: <defaults>
</compile_context>

<pallas_src>
import jax
import jax.numpy as jnp
from jax import lax
from jax.experimental import pallas as pl
from jax.experimental.pallas import tpu as pltpu


def _round_up(x, m):
    return (x + m - 1) // m * m


def _embed_kernel(ids_ref, table_ref, out_ref):
    """One grid step embeds a (TQ,) tile of flattened token ids.

    ids_ref   : VMEM (TQ, 1) int32   -- token ids for this tile
    table_ref : VMEM (V, D)  float32 -- merged [old ; new] embedding table
    out_ref   : VMEM (TQ, D) float32 -- output slab for this tile
    """
    tq = out_ref.shape[0]
    v = table_ref.shape[0]

    ids = ids_ref[...]                                    # (TQ, 1) int32
    col = lax.broadcasted_iota(jnp.int32, (tq, v), 1)     # (TQ, V)
    # One-hot gather on the MXU. Row-pick is exact (entries are 0/1) and
    # out-of-range ids (including -1 padding rows) yield an all-zero row,
    # so no out-of-bounds VMEM access can occur.
    onehot = (ids == col).astype(jnp.float32)             # (TQ, V)
    out_ref[...] = jnp.dot(
        onehot, table_ref[...], preferred_element_type=jnp.float32
    )


def custom_embedding_forward(input_ids, old_weights, new_weights,
                             old_vocab_size, *, tq=256):
    B, S = input_ids.shape
    V_old, D = old_weights.shape
    V_new, _ = new_weights.shape
    assert V_old == old_vocab_size

    # Merge the tables once: rows [0, V_old) are the frozen pretrained table,
    # rows [V_old, V_old+V_new) the new table, so token id == row index.
    table = jnp.concatenate(
        [old_weights.astype(jnp.float32), new_weights.astype(jnp.float32)],
        axis=0,
    )
    V = V_old + V_new
    V_pad = _round_up(V, 8)
    if V_pad != V:
        table = jnp.pad(table, ((0, V_pad - V), (0, 0)))

    # Flatten (B, S) and tile tokens -> large, dense (TQ, D) output blocks.
    N = B * S
    TQ = min(tq, _round_up(N, 8))
    N_pad = _round_up(N, TQ)
    ids = input_ids.reshape(N).astype(jnp.int32)
    ids = jnp.pad(ids, (0, N_pad - N), constant_values=-1).reshape(N_pad, 1)

    out = pl.pallas_call(
        _embed_kernel,
        out_shape=jax.ShapeDtypeStruct((N_pad, D), jnp.float32),
        grid_spec=pltpu.PrefetchScalarGridSpec(
            num_scalar_prefetch=0,
            grid=(N_pad // TQ,),
            in_specs=[
                # token ids for this tile (lane dim 1 == full dim, TQ % 8 == 0)
                pl.BlockSpec((TQ, 1), lambda t: (t, 0)),
                # merged table, VMEM-resident with a constant block index.
                # TODO(synk): for realistic vocab sizes (table >> VMEM,
                # especially v7x's 64 MiB) keep the table in HBM and switch to
                # a scalar-prefetch-driven per-row gather instead of residency.
                pl.BlockSpec((V_pad, D), lambda t: (0, 0)),
            ],
            out_specs=pl.BlockSpec((TQ, D), lambda t: (t, 0)),
        ),
        compiler_params=pltpu.CompilerParams(
            # token tiles write disjoint output blocks -> safe to shard
            # across TensorCores on megacore parts (v7x).
            dimension_semantics=("parallel",),
        ),
    )(ids, table)

    return out[:N].reshape(B, S, D)


def _reference(input_ids, old_weights, new_weights, old_vocab_size):
    is_old = input_ids < old_vocab_size
    old_emb = old_weights[jnp.where(is_old, input_ids, 0)]
    new_emb = new_weights[jnp.where(is_old, 0, input_ids - old_vocab_size)]
    return jnp.where(is_old[..., None], old_emb, new_emb).astype(jnp.float32)


if __name__ == "__main__":
    # Module hyperparameters (small, deterministic)
    OLD_VOCAB = 32
    NEW_VOCAB = 16
    EMB_DIM = 128
    PADDING_IDX = 0  # only affects init/grad in torch; forward is a plain lookup
    B, S = 2, 8

    key = jax.random.PRNGKey(0)
    k_old, k_new, k_ids = jax.random.split(key, 3)

    # "pretrained_weights" copied into the frozen old table; new table random init
    old_weights = jax.random.normal(k_old, (OLD_VOCAB, EMB_DIM), dtype=jnp.float32)
    new_weights = jax.random.normal(k_new, (NEW_VOCAB, EMB_DIM), dtype=jnp.float32)

    input_ids = jax.random.randint(
        k_ids, (B, S), minval=0, maxval=OLD_VOCAB + NEW_VOCAB, dtype=jnp.int32
    )

    out = custom_embedding_forward(input_ids, old_weights, new_weights, OLD_VOCAB)
    out = jax.block_until_ready(out)

    ref = _reference(input_ids, old_weights, new_weights, OLD_VOCAB)
    assert out.shape == (B, S, EMB_DIM)
    assert out.dtype == jnp.float32
    assert jnp.allclose(out, ref, rtol=1e-6, atol=1e-5), "mismatch vs reference"

    print("KERNEL_OK")
</pallas_src>

<mosaic_0001>
module attributes {stable_mosaic.version = 11 : i64} {
  func.func @_embed_kernel(%arg0: i32, %arg1: memref<16x1xi32, #tpu.memory_space<vmem>>, %arg2: memref<48x128xf32, #tpu.memory_space<vmem>>, %arg3: memref<16x128xf32, #tpu.memory_space<vmem>>) attributes {dimension_semantics = [#tpu.dimension_semantics<parallel>], iteration_bounds = array<i64: 1>, scalar_prefetch = 0 : i64, scratch_operands = 0 : i64, tpu.core_type = #tpu.core_type<tc>, window_params = [{transform_indices = @transform_0, window_bounds = array<i64: 16, 1>}, {pipeline_mode = #tpu.pipeline_mode<synchronous>, transform_indices = @transform_1, window_bounds = array<i64: 48, 128>}, {transform_indices = @transform_2, window_bounds = array<i64: 16, 128>}]} {
    %c0 = arith.constant 0 : index
    %c0_0 = arith.constant 0 : index
    %0 = vector.load %arg1[%c0, %c0_0] : memref<16x1xi32, #tpu.memory_space<vmem>>, vector<16x1xi32>
    %1 = tpu.iota {dimensions = array<i32: 1>} : vector<16x48xi32>
    %2 = vector.broadcast %0 : vector<16x1xi32> to vector<16x48xi32>
    %3 = arith.cmpi eq, %2, %1 : vector<16x48xi32>
    %4 = arith.extui %3 : vector<16x48xi1> to vector<16x48xi32>
    %5 = arith.sitofp %4 : vector<16x48xi32> to vector<16x48xf32>
    %c0_1 = arith.constant 0 : index
    %c0_2 = arith.constant 0 : index
    %6 = vector.load %arg2[%c0_1, %c0_2] : memref<48x128xf32, #tpu.memory_space<vmem>>, vector<48x128xf32>
    %cst = arith.constant dense<0.000000e+00> : vector<16x128xf32>
    %7 = tpu.matmul %5, %6, %cst {dimension_numbers = #tpu.dot_dimension_numbers<[1], [0], [0], [1], [0, 0, 1, 1], [], []>} : vector<16x48xf32>, vector<48x128xf32>, vector<16x128xf32> -> vector<16x128xf32>
    %c0_3 = arith.constant 0 : index
    %c0_4 = arith.constant 0 : index
    %8 = vector.load %arg3[%c0_3, %c0_4] : memref<16x128xf32, #tpu.memory_space<vmem>>, vector<16x128xf32>
    tpu.vector_store %arg3[%c0_3, %c0_4], %7 {strides = array<i32>} : memref<16x128xf32, #tpu.memory_space<vmem>>, vector<16x128xf32>,
    return
  }
  func.func @transform_0(%arg0: i32) -> (i32, i32) {
    %c0_i32 = arith.constant 0 : i32
    %c0_i32_0 = arith.constant 0 : i32
    return %arg0, %c0_i32 : i32, i32
  }
  func.func @transform_1(%arg0: i32) -> (i32, i32) {
    %c0_i32 = arith.constant 0 : i32
    %c0_i32_0 = arith.constant 0 : i32
    %c0_i32_1 = arith.constant 0 : i32
    return %c0_i32, %c0_i32_0 : i32, i32
  }
  func.func @transform_2(%arg0: i32) -> (i32, i32) {
    %c0_i32 = arith.constant 0 : i32
    %c0_i32_0 = arith.constant 0 : i32
    return %arg0, %c0_i32 : i32, i32
  }
}

</mosaic_0001>

<llo_original>
// kernel: tpu_custom_call.1
$region0: #{tpu_custom_call.1}
  #allocation0 [shape = 'u32[]', space=smem, size = 0x4, offset = 0x4, fixed_abs, tag = 'smem constant byte address 0x4 - core index']
  #allocation1 [shape = 'u32[144,128]{1,0:T(1,128)}', space=vmem, size = 0x12000, scoped, tag = 'internal scratch']
  %s0 = inlined_call_operand.vmem [shape: s32[16,1], index: 0, kind: input, shape index: {}]
  %s1 = inlined_call_operand.hbm [shape: f32[48,128], index: 1, kind: input, shape index: {}]
  %s2 = inlined_call_operand.hbm [shape: f32[16,128], index: 2, kind: output, shape index: {}]
  %s3 = sld [smem:[#allocation0]]
  $region22: #{tpu_custom_call.1} parent=0
    _
  %s5 = ssub.s32 1, %s3
  %s6 = scalar_select 0, %s5, %s3
  $region1: #{tpu_custom_call.1} parent=0
    #allocation2 [shape = 'u8[24576]{0}', space=vmem, size = 0x6000, scoped, tag = 'input window, operand 1, single buffered']
    #allocation3 [shape = 's32[1]{0}', space=sflag, size = 0x4, scoped, tag = 'scoped memory for tpu_custom_call.1']
    #allocation4 [shape = 's32[1]{0}', space=sflag, size = 0x4, scoped, tag = 'scoped memory for tpu_custom_call.1']
    #allocation5 [shape = 'u8[8192]{0}', space=vmem, size = 0x2000, scoped, tag = 'output window, operand 0, single buffered']
    %7 = vsyncpa [#allocation3], 0
    %8 = vsyncpa [#allocation4], 0
    // Predicated region
    $region2: #{tpu_custom_call.1} parent=1 // pred_check
      _
    $region3: #{tpu_custom_call.1} parent=1 // pred_check_branch
      %10 = sbr.rel (0) target = $region5
    $region4: #{tpu_custom_call.1} parent=1 // pred_region
      _
    $region5: #{tpu_custom_call.1} parent=1 // pred_fallthru
      _
    // Predicated region
    $region6: #{tpu_custom_call.1} parent=1 // pred_check
      _
    $region7: #{tpu_custom_call.1} parent=1 // pred_check_branch
      %12 = sbr.rel (0) target = $region9
    $region8: #{tpu_custom_call.1} parent=1 // pred_region
      %s14 = ssub.s32 768, 768
      %15 = vsyncadd [#allocation3], %s14
      %s16 = sshll.u32 [#allocation2], 4
      %s17 = int_to_ptr.vmem [resolvable:$true] %s16
      %22 = dma.hbm_to_vmem [thread:$0]  %s1, 768, %s17, [#allocation3], 128, 128, 8
    $region9: #{tpu_custom_call.1} parent=1 // pred_fallthru
      _
    // Predicated region
    $region10: #{tpu_custom_call.1} parent=1 // pred_check
      _
    $region11: #{tpu_custom_call.1} parent=1 // pred_check_branch
      %24 = sbr.rel (0) target = $region13
    $region12: #{tpu_custom_call.1} parent=1 // pred_region
      %25 = dma.done [#allocation3], 768
    $region13: #{tpu_custom_call.1} parent=1 // pred_fallthru
      _
    %v26 = vld [vmem:[%s0] sm:$0xff]
    %v27 = vld [vmem:[%s0 + $0x8] sm:$0xff]
    %v28 = vlaneseq
    %v29 = vand.u32 %v28, 127
    %30 = vset.pattern.permute.xlu0 0
    %31 = vperm.xlu0 %30, %v26
    %v32 = vpop.permute.xlu0 %31
    %33 = vset.pattern.permute.xlu0 0
    %34 = vperm.xlu0 %33, %v27
    %v35 = vpop.permute.xlu0 %34
    %vm36 = vcmp.eq.s32.totalorder %v32, %v29
    %vm37 = vcmp.eq.s32.totalorder %v35, %v29
    %v38 = vsel %vm36, 1, 0
    %v39 = vsel %vm37, 1, 0
    %v40 = vcvt.s32.f32 %v38
    %v41 = vcvt.s32.f32 %v39
    %v42 = vld [vmem:[#allocation2] sm:$0xff]
    %v43 = vld [vmem:[#allocation2 + $0x8] sm:$0xff]
    %v44 = vld [vmem:[#allocation2 + $0x10] sm:$0xff]
    %v45 = vld [vmem:[#allocation2 + $0x18] sm:$0xff]
    %v46 = vld [vmem:[#allocation2 + $0x20] sm:$0xff]
    %v47 = vld [vmem:[#allocation2 + $0x28] sm:$0xff]
    %vm48 = vcmask 392192
    %v50 = vsel %vm48, %v40, 0
    %v53 = vsel %vm48, %v41, 0
    %55 = vmatprep.subr.mxu0 0.0
    %56 = vmatpush1.msra.mxu0 0.0
    %57 = vmatprep.subr.mxu0 0.0
    %58 = vmatpush1.msra.mxu0 0.0
    %59 = vmatprep.subr.mxu0 0.0
    %60 = vmatpush1.msra.mxu0 0.0
    %61 = vmatprep.subr.mxu0 0.0
    %62 = vmatpush1.msra.mxu0 0.0
    %63 = vmatprep.subr.mxu0 0.0
    %64 = vmatpush1.msra.mxu0 0.0
    %65 = vmatprep.subr.mxu0 0.0
    %66 = vmatpush1.msra.mxu0 0.0
    %67 = vmatprep.subr.mxu0 0.0
    %68 = vmatpush1.msra.mxu0 0.0
    %69 = vmatprep.subr.mxu0 0.0
    %70 = vmatpush1.msra.mxu0 0.0
    %71 = vmatprep.subr.mxu0 0.0
    %72 = vmatpush1.msra.mxu0 0.0
    %73 = vmatprep.subr.mxu0 0.0
    %74 = vmatpush1.msra.mxu0 0.0
    %75 = vmatprep.subr.mxu0 0.0
    %76 = vmatpush1.msra.mxu0 %v47
    %77 = vmatprep.subr.mxu0 0.0
    %78 = vmatpush1.msra.mxu0 %v46
    %79 = vmatprep.subr.mxu0 0.0
    %80 = vmatpush1.msra.mxu0 %v45
    %81 = vmatprep.subr.mxu0 0.0
    %82 = vmatpush1.msra.mxu0 %v44
    %83 = vmatprep.subr.mxu0 0.0
    %84 = vmatpush1.msra.mxu0 %v43
    %85 = vmatprep.subr.mxu0 0.0
    %86 = vmatpush1.msra.mxu0 %v42
    %87 = vmatprep.subr.mxu0 0.0
    %88 = vmatpush2.msra.mxu0 0.0
    %89 = vmatprep.subr.mxu0 0.0
    %90 = vmatpush2.msra.mxu0 0.0
    %91 = vmatprep.subr.mxu0 0.0
    %92 = vmatpush2.msra.mxu0 0.0
    %93 = vmatprep.subr.mxu0 0.0
    %94 = vmatpush2.msra.mxu0 0.0
    %95 = vmatprep.subr.mxu0 0.0
    %96 = vmatpush2.msra.mxu0 0.0
    %97 = vmatprep.subr.mxu0 0.0
    %98 = vmatpush2.msra.mxu0 0.0
    %99 = vmatprep.subr.mxu0 0.0
    %100 = vmatpush2.msra.mxu0 0.0
    %101 = vmatprep.subr.mxu0 0.0
    %102 = vmatpush2.msra.mxu0 0.0
    %103 = vmatprep.subr.mxu0 0.0
    %104 = vmatpush2.msra.mxu0 0.0
    %105 = vmatprep.subr.mxu0 0.0
    %106 = vmatpush2.msra.mxu0 0.0
    %107 = vmatprep.subr.mxu0 0.0
    %108 = vmatpush2.msra.mxu0 0.0
    %109 = vmatprep.subr.mxu0 0.0
    %110 = vmatpush2.msra.mxu0 0.0
    %111 = vmatprep.subr.mxu0 0.0
    %112 = vmatpush2.msra.mxu0 0.0
    %113 = vmatprep.subr.mxu0 0.0
    %114 = vmatpush2.msra.mxu0 0.0
    %115 = vmatprep.subr.mxu0 0.0
    %116 = vmatpush2.msra.mxu0 0.0
    %117 = vmatprep.subr.mxu0 0.0
    %118 = vmatpush2.msra.mxu0 0.0
    %119 = vmatprep.mubr.f32.mxu0 0.0
    %120 = vmatmul.mubr.f32.gmra.mxu0 %v50
    %v121 = vpop.f32.mrf.mxu0
    %v122 = vadd.f32 0.0, %v121
    %v123 = vpop.f32.mrf.mxu0
    %124 = vmatprep.mubr.f32.mxu0 0.0
    %125 = vmatmul.mubr.f32.gmra.mxu0 %v53
    %v126 = vpop.f32.mrf.mxu0
    %v127 = vadd.f32 0.0, %v126
    %v128 = vpop.f32.mrf.mxu0
    %129 = vdwg.mxu0
    %130 = vst [vmem:[#allocation5] sm:$0xff] %v122
    %131 = vst [vmem:[#allocation5 + $0x8] sm:$0xff] %v127
    // Predicated region
    $region14: #{tpu_custom_call.1} parent=1 // pred_check
      _
    $region15: #{tpu_custom_call.1} parent=1 // pred_check_branch
      %133 = sbr.rel (0) target = $region17
    $region16: #{tpu_custom_call.1} parent=1 // pred_region
      %s135 = ssub.s32 256, 256
      %136 = vsyncadd [#allocation4], %s135
      %s137 = sshll.u32 [#allocation5], 4
      %s138 = int_to_ptr.vmem [resolvable:$true] %s137
      %143 = dma.vmem_to_hbm [thread:$0]  %s138, 256, %s2, [#allocation4], 128, 128, 8
    $region17: #{tpu_custom_call.1} parent=1 // pred_fallthru
      _
    // Predicated region
    $region18: #{tpu_custom_call.1} parent=1 // pred_check
      _
    $region19: #{tpu_custom_call.1} parent=1 // pred_check_branch
      %145 = sbr.rel (0) target = $region21
    $region20: #{tpu_custom_call.1} parent=1 // pred_region
      %146 = dma.done [#allocation4], 256
    $region21: #{tpu_custom_call.1} parent=1 // pred_fallthru
      _
    %147 = vsyncpa [#allocation3], 1
    %148 = vsyncpa [#allocation4], 1

</llo_original>
